<compile_context>
chip_gen: v7x
topology: tpu7x:2x2x1
jax: 0.10.0
libtpu: 0.0.40
codegen_flags: <defaults>
</compile_context>

<pallas_src>
import jax
import jax.numpy as jnp
from jax.experimental import pallas as pl
from jax.experimental.pallas import tpu as pltpu

EPS = 1e-5
NEG_SLOPE = 0.05


def _leaky_mlp_kernel(x_ref, w_ref, p_ref, o_ref, acc_ref):
    """One (TM, O) output tile; K (hidden) axis is the last grid dim.

    x_ref:   (TM, TK) input tile (pipelined over M and K)
    w_ref:   (TK, O)  weight^T tile (resident when TK == H)
    p_ref:   (3, O)   fused f32 params: row 0 = bias, 1 = gamma, 2 = beta
    o_ref:   (TM, O)  output tile (written only on the last K step)
    acc_ref: (TM, O)  f32 accumulator scratch
    """
    k = pl.program_id(1)

    @pl.when(k == 0)
    def _init():
        acc_ref[...] = jnp.zeros_like(acc_ref)

    w = w_ref[...]
    x = x_ref[...].astype(w.dtype)  # bf16 feed to the MXU when enabled
    acc_ref[...] += jnp.dot(x, w, preferred_element_type=jnp.float32)

    @pl.when(k == pl.num_programs(1) - 1)
    def _epilogue():
        p = p_ref[...]
        h = acc_ref[...] + p[0:1, :]                      # + bias
        u = jnp.mean(h, axis=-1, keepdims=True)           # LayerNorm (biased variance)
        d = h - u
        s = jnp.mean(d * d, axis=-1, keepdims=True)
        inv = jax.lax.rsqrt(s + EPS)                      # EUP rsqrt, no per-element divide
        y = p[1:2, :] * (d * inv) + p[2:3, :]
        # LeakyReLU(0.05): max(y, 0.05*y) since 0 < slope < 1
        o_ref[...] = jnp.maximum(y, NEG_SLOPE * y).astype(o_ref.dtype)


def _vmem_capacity_bytes():
    try:
        return int(pltpu.get_tpu_info().vmem_capacity_bytes)
    except Exception:
        return 64 << 20  # conservative: v7x per-TC VMEM


def _choose_tiles(M, H, O, x_itemsize, w_itemsize, out_itemsize, cap):
    """Pick (TM, TK) so double-buffered tiles + resident params fit a per-TC budget."""
    budget = int(cap * 0.45)  # working-set budget; leave headroom for compiler scratch

    # K tiling: keep W^T resident unless its double-buffered footprint is too big.
    tk = H
    if 2 * H * O * w_itemsize > cap // 3:
        for cand in range((H // 128) * 128, 0, -128):
            if H % cand == 0 and 2 * cand * O * w_itemsize <= cap // 3:
                tk = cand
                break

    # M tiling: double-buffered x/out tiles + f32 acc scratch + ~3 epilogue temporaries.
    resident = 2 * tk * O * w_itemsize + 2 * 8 * O * 4
    per_row = (2 * tk * x_itemsize        # x tile, double-buffered
               + 2 * O * out_itemsize     # out tile, double-buffered
               + 4 * O * 4)               # f32 acc scratch + epilogue temporaries
    avail = max(budget - resident, 1 << 20)
    tm = int(avail // per_row)

    align = 16  # bf16 sublane packing; also fine for f32
    if tm >= 1024:
        tm = 1024
    elif tm >= 256:
        tm = (tm // 256) * 256            # full MXU sublane occupancy per pass
    elif tm >= 128:
        tm = 128
    else:
        tm = max(align, (tm // align) * align)

    m_ceil = ((M + align - 1) // align) * align
    tm = min(tm, m_ceil)

    # Prefer a tile that divides M exactly (avoids whole-array pad + slice HBM copies).
    if M > tm and M % tm != 0:
        for cand in range(tm, max(tm // 2, align) - 1, -align):
            if M % cand == 0:
                tm = cand
                break
    return int(tm), int(tk)


def leaky_mlp(x, weight, bias, ln_gamma, ln_beta, *, use_bf16=True, out_dtype=jnp.float32):
    """Fused Linear -> LayerNorm -> LeakyReLU(0.05).

    x: (..., H); weight: (O, H) [PyTorch nn.Linear layout]; bias/gamma/beta: (O,).
    """
    orig_shape = x.shape
    H = orig_shape[-1]
    O = weight.shape[0]

    x2d = x.reshape(-1, H)
    if x2d.dtype not in (jnp.float32, jnp.bfloat16):
        x2d = x2d.astype(jnp.float32)
    M = x2d.shape[0]

    w_dtype = jnp.bfloat16 if use_bf16 else jnp.float32
    w_t = weight.T.astype(w_dtype)                                    # (H, O)
    params = jnp.stack([bias, ln_gamma, ln_beta]).astype(jnp.float32)  # (3, O), f32 epilogue

    cap = _vmem_capacity_bytes()
    tm, tk = _choose_tiles(M, H, O,
                           jnp.dtype(x2d.dtype).itemsize,
                           jnp.dtype(w_dtype).itemsize,
                           jnp.dtype(out_dtype).itemsize,
                           cap)

    n_m = pl.cdiv(M, tm)
    n_k = max(H // tk, 1)
    Mp = n_m * tm
    if Mp != M:
        # Zero rows are benign (per-row LN -> beta) and are sliced off below.
        x2d = jnp.pad(x2d, ((0, Mp - M), (0, 0)))

    # VMEM limit: double-buffered tiles + params + f32 temporaries, with headroom, capped
    # below physical per-TC capacity (64 MiB on v7x, 128 MiB on v5e/v6e).
    need = (2 * tk * O * jnp.dtype(w_dtype).itemsize
            + 2 * 8 * O * 4
            + 2 * tm * tk * jnp.dtype(x2d.dtype).itemsize
            + 2 * tm * O * jnp.dtype(out_dtype).itemsize
            + 4 * tm * O * 4)
    vmem_limit = int(min(int(cap * 0.85), max(32 << 20, int(1.25 * need))))

    out = pl.pallas_call(
        _leaky_mlp_kernel,
        out_shape=jax.ShapeDtypeStruct((Mp, O), out_dtype),
        grid_spec=pltpu.PrefetchScalarGridSpec(
            num_scalar_prefetch=0,
            grid=(n_m, n_k),                                   # K (reduction) last
            in_specs=[
                pl.BlockSpec((tm, tk), lambda i, k: (i, k)),   # x tile (pipelined)
                pl.BlockSpec((tk, O), lambda i, k: (k, 0)),    # W^T tile (resident if n_k==1)
                pl.BlockSpec((3, O), lambda i, k: (0, 0)),     # fused bias/gamma/beta
            ],
            out_specs=pl.BlockSpec((tm, O), lambda i, k: (i, 0)),
            scratch_shapes=[pltpu.VMEM((tm, O), jnp.float32)],
        ),
        compiler_params=pltpu.CompilerParams(
            dimension_semantics=("parallel", "arbitrary"),
            vmem_limit_bytes=vmem_limit,
        ),
    )(x2d, w_t, params)

    if Mp != M:
        out = out[:M]
    return out.reshape(*orig_shape[:-1], O)


def _reference(x, weight, bias, ln_gamma, ln_beta):
    h = jnp.einsum("...h,oh->...o", x, weight) + bias
    u = jnp.mean(h, axis=-1, keepdims=True)
    s = jnp.mean((h - u) ** 2, axis=-1, keepdims=True)
    xn = (h - u) / jnp.sqrt(s + EPS)
    y = ln_gamma * xn + ln_beta
    return jnp.where(y >= 0, y, NEG_SLOPE * y)


if __name__ == "__main__":
    key = jax.random.PRNGKey(0)
    B, S, H = 2, 8, 32
    O = H  # out_features defaults to hidden_size

    k_x, k_w, k_b, _ = jax.random.split(key, 4)
    x = jax.random.normal(k_x, (B, S, H), dtype=jnp.float32)

    # Deterministic parameter init (PyTorch-like uniform for Linear; LN = ones/zeros).
    bound = 1.0 / jnp.sqrt(jnp.float32(H))
    weight = jax.random.uniform(k_w, (O, H), minval=-bound, maxval=bound, dtype=jnp.float32)
    bias = jax.random.uniform(k_b, (O,), minval=-bound, maxval=bound, dtype=jnp.float32)
    ln_gamma = jnp.ones((O,), dtype=jnp.float32)
    ln_beta = jnp.zeros((O,), dtype=jnp.float32)

    out = leaky_mlp(x, weight, bias, ln_gamma, ln_beta, use_bf16=True)
    out = jax.block_until_ready(out)

    ref = _reference(x, weight, bias, ln_gamma, ln_beta)
    assert out.shape == (B, S, O)
    # bf16 matmul feed (f32 accumulate + f32 LN/LeakyReLU epilogue) -> loosened tolerance.
    assert jnp.allclose(out, ref, atol=2e-2, rtol=2e-2), "mismatch vs reference"

    print("KERNEL_OK")
</pallas_src>

<mosaic_0001>
module attributes {stable_mosaic.version = 11 : i64} {
  func.func @_leaky_mlp_kernel(%arg0: i32, %arg1: i32, %arg2: memref<16x32xf32, #tpu.memory_space<vmem>>, %arg3: memref<32x32xbf16, #tpu.memory_space<vmem>>, %arg4: memref<3x32xf32, #tpu.memory_space<vmem>>, %arg5: memref<16x32xf32, #tpu.memory_space<vmem>>, %arg6: memref<16x32xf32, #tpu.memory_space<vmem>>) attributes {dimension_semantics = [#tpu.dimension_semantics<parallel>, #tpu.dimension_semantics<arbitrary>], iteration_bounds = array<i64: 1, 1>, scalar_prefetch = 0 : i64, scratch_operands = 1 : i64, tpu.core_type = #tpu.core_type<tc>, window_params = [{transform_indices = @transform_0, window_bounds = array<i64: 16, 32>}, {transform_indices = @transform_1, window_bounds = array<i64: 32, 32>}, {pipeline_mode = #tpu.pipeline_mode<synchronous>, transform_indices = @transform_2, window_bounds = array<i64: 3, 32>}, {transform_indices = @transform_3, window_bounds = array<i64: 16, 32>}]} {
    %c0_i32 = arith.constant 0 : i32
    %0 = arith.cmpi eq, %arg1, %c0_i32 : i32
    %1 = arith.extui %0 : i1 to i32
    %c0_i32_0 = arith.constant 0 : i32
    %2 = arith.cmpi ne, %1, %c0_i32_0 : i32
    scf.if %2 {
      %cst_10 = arith.constant 0.000000e+00 : f32
      %13 = vector.broadcast %cst_10 : f32 to vector<16x32xf32>
      %c0_11 = arith.constant 0 : index
      %c0_12 = arith.constant 0 : index
      %14 = vector.load %arg6[%c0_11, %c0_12] : memref<16x32xf32, #tpu.memory_space<vmem>>, vector<16x32xf32>
      tpu.vector_store %arg6[%c0_11, %c0_12], %13 {strides = array<i32>} : memref<16x32xf32, #tpu.memory_space<vmem>>, vector<16x32xf32>,
    } else {
    }
    %c0 = arith.constant 0 : index
    %c0_1 = arith.constant 0 : index
    %3 = vector.load %arg3[%c0, %c0_1] : memref<32x32xbf16, #tpu.memory_space<vmem>>, vector<32x32xbf16>
    %c0_2 = arith.constant 0 : index
    %c0_3 = arith.constant 0 : index
    %4 = vector.load %arg2[%c0_2, %c0_3] : memref<16x32xf32, #tpu.memory_space<vmem>>, vector<16x32xf32>
    %5 = arith.truncf %4 : vector<16x32xf32> to vector<16x32xbf16>
    %c0_4 = arith.constant 0 : index
    %c0_5 = arith.constant 0 : index
    %6 = vector.load %arg6[%c0_4, %c0_5] : memref<16x32xf32, #tpu.memory_space<vmem>>, vector<16x32xf32>
    %cst = arith.constant dense<0.000000e+00> : vector<16x32xf32>
    %7 = tpu.matmul %5, %3, %cst {dimension_numbers = #tpu.dot_dimension_numbers<[1], [0], [0], [1], [0, 0, 1, 1], [], []>} : vector<16x32xbf16>, vector<32x32xbf16>, vector<16x32xf32> -> vector<16x32xf32>
    %8 = arith.addf %6, %7 : vector<16x32xf32>
    %c0_6 = arith.constant 0 : index
    %c0_7 = arith.constant 0 : index
    %9 = vector.load %arg6[%c0_6, %c0_7] : memref<16x32xf32, #tpu.memory_space<vmem>>, vector<16x32xf32>
    tpu.vector_store %arg6[%c0_6, %c0_7], %8 {strides = array<i32>} : memref<16x32xf32, #tpu.memory_space<vmem>>, vector<16x32xf32>,
    %c0_i32_8 = arith.constant 0 : i32
    %10 = arith.cmpi eq, %arg1, %c0_i32_8 : i32
    %11 = arith.extui %10 : i1 to i32
    %c0_i32_9 = arith.constant 0 : i32
    %12 = arith.cmpi ne, %11, %c0_i32_9 : i32
    scf.if %12 {
      %c0_10 = arith.constant 0 : index
      %c0_11 = arith.constant 0 : index
      %13 = vector.load %arg4[%c0_10, %c0_11] : memref<3x32xf32, #tpu.memory_space<vmem>>, vector<3x32xf32>
      %c0_12 = arith.constant 0 : index
      %c0_13 = arith.constant 0 : index
      %14 = vector.load %arg6[%c0_12, %c0_13] : memref<16x32xf32, #tpu.memory_space<vmem>>, vector<16x32xf32>
      %15 = vector.extract_strided_slice %13 {offsets = [0, 0], sizes = [1, 32], strides = [1, 1]} : vector<3x32xf32> to vector<1x32xf32>
      %16 = vector.broadcast %15 : vector<1x32xf32> to vector<16x32xf32>
      %17 = arith.addf %14, %16 : vector<16x32xf32>
      %cst_14 = arith.constant dense<0.000000e+00> : vector<16xf32>
      %18 = vector.multi_reduction <add>, %17, %cst_14 [1] : vector<16x32xf32> to vector<16xf32>
      %19 = vector.shape_cast %18 : vector<16xf32> to vector<16x1xf32>
      %cst_15 = arith.constant 3.200000e+01 : f32
      %20 = vector.broadcast %cst_15 : f32 to vector<16x1xf32>
      %21 = arith.divf %19, %20 : vector<16x1xf32>
      %22 = vector.broadcast %21 : vector<16x1xf32> to vector<16x32xf32>
      %23 = arith.subf %17, %22 : vector<16x32xf32>
      %24 = arith.mulf %23, %23 : vector<16x32xf32>
      %cst_16 = arith.constant dense<0.000000e+00> : vector<16xf32>
      %25 = vector.multi_reduction <add>, %24, %cst_16 [1] : vector<16x32xf32> to vector<16xf32>
      %26 = vector.shape_cast %25 : vector<16xf32> to vector<16x1xf32>
      %cst_17 = arith.constant 3.200000e+01 : f32
      %27 = vector.broadcast %cst_17 : f32 to vector<16x1xf32>
      %28 = arith.divf %26, %27 : vector<16x1xf32>
      %cst_18 = arith.constant 9.99999974E-6 : f32
      %29 = vector.broadcast %cst_18 : f32 to vector<16x1xf32>
      %30 = arith.addf %28, %29 : vector<16x1xf32>
      %31 = math.rsqrt %30 : vector<16x1xf32>
      %32 = vector.extract_strided_slice %13 {offsets = [1, 0], sizes = [1, 32], strides = [1, 1]} : vector<3x32xf32> to vector<1x32xf32>
      %33 = vector.broadcast %31 : vector<16x1xf32> to vector<16x32xf32>
      %34 = arith.mulf %23, %33 : vector<16x32xf32>
      %35 = vector.broadcast %32 : vector<1x32xf32> to vector<16x32xf32>
      %36 = arith.mulf %35, %34 : vector<16x32xf32>
      %37 = vector.extract_strided_slice %13 {offsets = [2, 0], sizes = [1, 32], strides = [1, 1]} : vector<3x32xf32> to vector<1x32xf32>
      %38 = vector.broadcast %37 : vector<1x32xf32> to vector<16x32xf32>
      %39 = arith.addf %36, %38 : vector<16x32xf32>
      %cst_19 = arith.constant 5.000000e-02 : f32
      %40 = vector.broadcast %cst_19 : f32 to vector<16x32xf32>
      %41 = arith.mulf %40, %39 : vector<16x32xf32>
      %42 = arith.maximumf %39, %41 : vector<16x32xf32>
      %c0_20 = arith.constant 0 : index
      %c0_21 = arith.constant 0 : index
      %43 = vector.load %arg5[%c0_20, %c0_21] : memref<16x32xf32, #tpu.memory_space<vmem>>, vector<16x32xf32>
      tpu.vector_store %arg5[%c0_20, %c0_21], %42 {strides = array<i32>} : memref<16x32xf32, #tpu.memory_space<vmem>>, vector<16x32xf32>,
    } else {
    }
    return
  }
  func.func @transform_0(%arg0: i32, %arg1: i32) -> (i32, i32) {
    %c0_i32 = arith.constant 0 : i32
    return %arg0, %arg1 : i32, i32
  }
  func.func @transform_1(%arg0: i32, %arg1: i32) -> (i32, i32) {
    %c0_i32 = arith.constant 0 : i32
    %c0_i32_0 = arith.constant 0 : i32
    return %arg1, %c0_i32 : i32, i32
  }
  func.func @transform_2(%arg0: i32, %arg1: i32) -> (i32, i32) {
    %c0_i32 = arith.constant 0 : i32
    %c0_i32_0 = arith.constant 0 : i32
    %c0_i32_1 = arith.constant 0 : i32
    return %c0_i32, %c0_i32_0 : i32, i32
  }
  func.func @transform_3(%arg0: i32, %arg1: i32) -> (i32, i32) {
    %c0_i32 = arith.constant 0 : i32
    %c0_i32_0 = arith.constant 0 : i32
    return %arg0, %c0_i32 : i32, i32
  }
}

</mosaic_0001>

<llo_original>
// kernel: tpu_custom_call.1
$region0: #{tpu_custom_call.1}
  #allocation0 [shape = 'u32[]', space=smem, size = 0x4, offset = 0x4, fixed_abs, tag = 'smem constant byte address 0x4 - core index']
  #allocation1 [shape = 'u32[144,128]{1,0:T(1,128)}', space=vmem, size = 0x12000, scoped, tag = 'internal scratch']
  #allocation2 [shape = 'f32[16,32]{1,0:T(8,128)}', space=vmem, size = 0x2000, scoped, tag = 'scratch operand']
  %s0 = inlined_call_operand.hbm [shape: f32[16,32], index: 0, kind: input, shape index: {}]
  %s1 = inlined_call_operand.hbm [shape: bf16[32,32], index: 1, kind: input, shape index: {}]
  %s2 = inlined_call_operand.vmem [shape: f32[3,32], index: 2, kind: input, shape index: {}]
  %s3 = inlined_call_operand.hbm [shape: f32[16,32], index: 3, kind: output, shape index: {}]
  %s4 = sld [smem:[#allocation0]]
  $region38: #{tpu_custom_call.1} parent=0
    _
  %s6 = ssub.s32 1, %s4
  %s7 = scalar_select 0, %s6, %s4
  $region1: #{tpu_custom_call.1} parent=0
    #allocation3 [shape = 'u8[8192]{0}', space=vmem, size = 0x2000, scoped, tag = 'input window, operand 0, single buffered']
    #allocation4 [shape = 's32[1]{0}', space=sflag, size = 0x4, scoped, tag = 'scoped memory for tpu_custom_call.1']
    #allocation5 [shape = 's32[1]{0}', space=sflag, size = 0x4, scoped, tag = 'scoped memory for tpu_custom_call.1']
    #allocation6 [shape = 'u8[8192]{0}', space=vmem, size = 0x2000, scoped, tag = 'input window, operand 1, single buffered']
    #allocation7 [shape = 's32[1]{0}', space=sflag, size = 0x4, scoped, tag = 'scoped memory for tpu_custom_call.1']
    #allocation8 [shape = 'u8[8192]{0}', space=vmem, size = 0x2000, scoped, tag = 'output window, operand 0, single buffered']
    %8 = vsyncpa [#allocation4], 0
    %9 = vsyncpa [#allocation7], 0
    %10 = vsyncpa [#allocation5], 0
    // Predicated region
    $region2: #{tpu_custom_call.1} parent=1 // pred_check
      _
    $region3: #{tpu_custom_call.1} parent=1 // pred_check_branch
      %12 = sbr.rel (0) target = $region5
    $region4: #{tpu_custom_call.1} parent=1 // pred_region
      %s14 = ssub.s32 256, 256
      %15 = vsyncadd [#allocation4], %s14
      %s16 = sshll.u32 [#allocation3], 4
      %s17 = int_to_ptr.vmem [resolvable:$true] %s16
      %22 = dma.hbm_to_vmem [thread:$0]  %s0, 256, %s17, [#allocation4], 128, 128, 8
    $region5: #{tpu_custom_call.1} parent=1 // pred_fallthru
      _
    // Predicated region
    $region6: #{tpu_custom_call.1} parent=1 // pred_check
      _
    $region7: #{tpu_custom_call.1} parent=1 // pred_check_branch
      %24 = sbr.rel (0) target = $region9
    $region8: #{tpu_custom_call.1} parent=1 // pred_region
      %s26 = ssub.s32 256, 256
      %27 = vsyncadd [#allocation7], %s26
      %s28 = sshll.u32 [#allocation6], 4
      %s29 = int_to_ptr.vmem [resolvable:$true] %s28
      %34 = dma.hbm_to_vmem [thread:$0]  %s1, 256, %s29, [#allocation7], 64, 64, 4
    $region9: #{tpu_custom_call.1} parent=1 // pred_fallthru
      _
    // Predicated region
    $region10: #{tpu_custom_call.1} parent=1 // pred_check
      _
    $region11: #{tpu_custom_call.1} parent=1 // pred_check_branch
      %36 = sbr.rel (0) target = $region13
    $region12: #{tpu_custom_call.1} parent=1 // pred_region
      _
    $region13: #{tpu_custom_call.1} parent=1 // pred_fallthru
      _
    // Predicated region
    $region14: #{tpu_custom_call.1} parent=1 // pred_check
      _
    $region15: #{tpu_custom_call.1} parent=1 // pred_check_branch
      %38 = sbr.rel (0) target = $region17
    $region16: #{tpu_custom_call.1} parent=1 // pred_region
      %39 = dma.done [#allocation4], 256
    $region17: #{tpu_custom_call.1} parent=1 // pred_fallthru
      _
    // Predicated region
    $region18: #{tpu_custom_call.1} parent=1 // pred_check
      _
    $region19: #{tpu_custom_call.1} parent=1 // pred_check_branch
      %41 = sbr.rel (0) target = $region21
    $region20: #{tpu_custom_call.1} parent=1 // pred_region
      %42 = dma.done [#allocation7], 256
    $region21: #{tpu_custom_call.1} parent=1 // pred_fallthru
      _
    %p44 = scmp.eq.s32.totalorder 0, 0
    // Predicated region
    $region22: #{tpu_custom_call.1} parent=1 // pred_check
      %p45 = pneg %p44
    $region23: #{tpu_custom_call.1} parent=1 // pred_check_branch
      %47 = sbr.rel (%p45) target = $region25
    $region24: #{tpu_custom_call.1} parent=1 // pred_region
      %vm48 = vcmask 261120
      %49 = vst.msk [vmem:[#allocation2] sm:$0xff] %vm48, 0.0
      %50 = vst.msk [vmem:[#allocation2 + $0x8] sm:$0xff] %vm48, 0.0
    $region25: #{tpu_custom_call.1} parent=1 // pred_fallthru
      _
    %v51 = vld [vmem:[#allocation6] sm:$0xf]
    %v52 = vld [vmem:[#allocation6 + $0x4] sm:$0xf]
    %v53 = vld [vmem:[#allocation6 + $0x8] sm:$0xf]
    %v54 = vld [vmem:[#allocation6 + $0xc] sm:$0xf]
    %v55 = vld [vmem:[#allocation3] sm:$0xff]
    %v56 = vld [vmem:[#allocation3 + $0x8] sm:$0xff]
    %v57 = vpack.c.bf16 %v56, %v55
    %v58 = vld [vmem:[#allocation2] sm:$0xff]
    %v59 = vld [vmem:[#allocation2 + $0x8] sm:$0xff]
    %v64 = vunpack.c.l.b16 %v51
    %v65 = vunpack.c.l.b16 %v52
    %v66 = vunpack.c.l.b16 %v53
    %v67 = vunpack.c.l.b16 %v54
    %v68 = vpack.c.b16 %v65, %v64
    %v69 = vpack.c.b16 %v67, %v66
    %vm72 = vcmask 261120
    %v74 = vsel %vm72, %v57, 0
    %76 = vmatprep.subr.bf16.mxu0 0
    %77 = vmatpush1.bf16.msra.mxu0 %v68
    %78 = vmatprep.subr.bf16.mxu0 0
    %79 = vmatpush1.bf16.msra.mxu0 %v69
    %80 = vmatprep.subr.bf16.mxu0 0
    %81 = vmatpush1.bf16.msra.mxu0 0
    %82 = vmatprep.subr.bf16.mxu0 0
    %83 = vmatpush1.bf16.msra.mxu0 0
    %84 = vmatprep.subr.bf16.mxu0 0
    %85 = vmatpush1.bf16.msra.mxu0 0
    %86 = vmatprep.subr.bf16.mxu0 0
    %87 = vmatpush1.bf16.msra.mxu0 0
    %88 = vmatprep.subr.bf16.mxu0 0
    %89 = vmatpush1.bf16.msra.mxu0 0
    %90 = vmatprep.subr.bf16.mxu0 0
    %91 = vmatpush1.bf16.msra.mxu0 0
    %92 = vmatprep.subr.bf16.mxu0 0
    %93 = vmatpush1.bf16.msra.mxu0 0
    %94 = vmatprep.subr.bf16.mxu0 0
    %95 = vmatpush1.bf16.msra.mxu0 0
    %96 = vmatprep.subr.bf16.mxu0 0
    %97 = vmatpush1.bf16.msra.mxu0 0
    %98 = vmatprep.subr.bf16.mxu0 0
    %99 = vmatpush1.bf16.msra.mxu0 0
    %100 = vmatprep.subr.bf16.mxu0 0
    %101 = vmatpush1.bf16.msra.mxu0 0
    %102 = vmatprep.subr.bf16.mxu0 0
    %103 = vmatpush1.bf16.msra.mxu0 0
    %104 = vmatprep.subr.bf16.mxu0 0
    %105 = vmatpush1.bf16.msra.mxu0 0
    %106 = vmatprep.subr.bf16.mxu0 0
    %107 = vmatpush1.bf16.msra.mxu0 0
    %108 = vmatprep.mubr.bf16.mxu0 0
    %109 = vmatmul.mubr.bf16.gmra.mrb[0].mxu0 %v74
    %v110 = vpop.f32.mrb[0].mxu0
    %v111 = vadd.f32 0.0, %v110
    %v112 = vpop.f32.mrb[0].mxu0
    %v113 = vpop.f32.mrb[0].mxu0
    %v114 = vadd.f32 0.0, %v113
    %v115 = vpop.f32.mrb[0].mxu0
    %116 = vdwg.mxu0
    %v117 = vadd.f32 %v58, %v111
    %v118 = vadd.f32 %v59, %v114
    %119 = vst.msk [vmem:[#allocation2] sm:$0xff] %vm72, %v117
    %120 = vst.msk [vmem:[#allocation2 + $0x8] sm:$0xff] %vm72, %v118
    // Predicated region
    $region26: #{tpu_custom_call.1} parent=1 // pred_check
      %p121 = pneg %p44
    $region27: #{tpu_custom_call.1} parent=1 // pred_check_branch
      %123 = sbr.rel (%p121) target = $region29
    $region28: #{tpu_custom_call.1} parent=1 // pred_region
      %v124 = vld [vmem:[%s2] sm:$0x7]
      %v125 = vld [vmem:[#allocation2] sm:$0xff]
      %v126 = vld [vmem:[#allocation2 + $0x8] sm:$0xff]
      %v127 = vlaneseq
      %v128 = vshrl.u32 %v127, 7
      %v129 = vsub.s32 0, %v128
      %v130 = vrot.slane %v124, %v129
      %v131 = vadd.f32 %v125, %v130
      %v132 = vadd.f32 %v126, %v130
      %v133 = vsel %vm72, %v131, 0.0
      %134 = vadd.xlane.f32.xlu0 %v133
      %v135 = vpop.xlane.xlu0 %134
      %v136 = vsel %vm72, %v132, 0.0
      %137 = vadd.xlane.f32.xlu0 %v136
      %v138 = vpop.xlane.xlu0 %137
      %v139 = vrcp.pop 32.0
      %v140 = vmul.f32 %v135, %v139
      %v141 = vmul.f32 %v138, %v139
      %v142 = vsub.f32 %v131, %v140
      %v143 = vsub.f32 %v132, %v141
      %v144 = vmul.f32 %v142, %v142
      %v145 = vmul.f32 %v143, %v143
      %v146 = vsel %vm72, %v144, 0.0
      %147 = vadd.xlane.f32.xlu0 %v146
      %v148 = vpop.xlane.xlu0 %147
      %v149 = vsel %vm72, %v145, 0.0
      %150 = vadd.xlane.f32.xlu0 %v149
      %v151 = vpop.xlane.xlu0 %150
      %v152 = vmul.f32 %v148, %v139
      %v153 = vmul.f32 %v151, %v139
      %v154 = vadd.f32 %v152, 1e-05
      %v155 = vadd.f32 %v153, 1e-05
      %v156 = vrsqrt.pop %v154
      %v157 = vrsqrt.pop %v155
      %v158 = vmul.f32 %v142, %v156
      %v159 = vmul.f32 %v143, %v157
      %v160 = vlaneseq
      %v161 = vshrl.u32 %v160, 7
      %v162 = vsub.s32 1, %v161
      %v163 = vrot.slane %v124, %v162
      %v164 = vmul.f32 %v163, %v158
      %v165 = vmul.f32 %v163, %v159
      %v166 = vlaneseq
      %v167 = vshrl.u32 %v166, 7
      %v168 = vsub.s32 2, %v167
      %v169 = vrot.slane %v124, %v168
      %v170 = vadd.f32 %v164, %v169
      %v171 = vadd.f32 %v165, %v169
      %v172 = vmul.f32 %v170, 0.05
      %v173 = vmul.f32 %v171, 0.05
      %v174 = vmax.f32 %v170, %v172
      %v175 = vmax.f32 %v171, %v173
      %176 = vst.msk [vmem:[#allocation8] sm:$0xff] %vm72, %v174
      %177 = vst.msk [vmem:[#allocation8 + $0x8] sm:$0xff] %vm72, %v175
    $region29: #{tpu_custom_call.1} parent=1 // pred_fallthru
      _
    // Predicated region
    $region30: #{tpu_custom_call.1} parent=1 // pred_check
      _
    $region31: #{tpu_custom_call.1} parent=1 // pred_check_branch
      %179 = sbr.rel (0) target = $region33
    $region32: #{tpu_custom_call.1} parent=1 // pred_region
      %s181 = ssub.s32 256, 256
      %182 = vsyncadd [#allocation5], %s181
      %s183 = sshll.u32 [#allocation8], 4
      %s184 = int_to_ptr.vmem [resolvable:$true] %s183
      %189 = dma.vmem_to_hbm [thread:$0]  %s184, 256, %s3, [#allocation5], 128, 128, 8
    $region33: #{tpu_custom_call.1} parent=1 // pred_fallthru
      _
    // Predicated region
    $region34: #{tpu_custom_call.1} parent=1 // pred_check
      _
    $region35: #{tpu_custom_call.1} parent=1 // pred_check_branch
      %191 = sbr.rel (0) target = $region37
    $region36: #{tpu_custom_call.1} parent=1 // pred_region
      %192 = dma.done [#allocation5], 256
    $region37: #{tpu_custom_call.1} parent=1 // pred_fallthru
      _
    %193 = vsyncpa [#allocation4], 1
    %194 = vsyncpa [#allocation7], 1
    %195 = vsyncpa [#allocation5], 1

</llo_original>
